<compile_context>
chip_gen: v7x
topology: tpu7x:2x2x1
jax: 0.10.0
libtpu: 0.0.40
codegen_flags: <defaults>
</compile_context>

<pallas_src>
import functools

import jax
import jax.numpy as jnp
from jax.experimental import pallas as pl
from jax.experimental.pallas import tpu as pltpu

K_STACKS = 2  # ARMAConv(num_stacks=2, num_layers=1)


# ----------------------------------------------------------------------------
# Hardware-aware sizing
# ----------------------------------------------------------------------------
@functools.lru_cache(maxsize=None)
def _vmem_capacity_bytes():
    try:
        return int(pltpu.get_tpu_info().vmem_capacity_bytes)
    except Exception:
        return 64 * 1024 * 1024  # conservative fallback (v7x per-TC VMEM)


@functools.lru_cache(maxsize=None)
def _vmem_limit_bytes():
    # Leave ~16 MiB headroom for compiler-internal scratch / spills.
    return max(32 * 1024 * 1024, _vmem_capacity_bytes() - 16 * 1024 * 1024)


def _resident_vmem_bytes(n, nfeat, nhid, nclass):
    """Rough single-buffered VMEM estimate for the fully-resident fused path."""
    b = n * n * 2                                   # adjacency, bf16
    b += n * nfeat * 2                              # x, bf16
    b += n * 128 * 4                                # dinv f32 (lane-padded)
    b += (nfeat * 4 * nhid + nhid * 4 * nclass) * 2 # packed weights, bf16
    b += n * 4 * nhid * 4 + n * 4 * nclass * 4      # per-layer activations, f32
    b += n * 128 * 4                                # output (lane-padded)
    return b


def _pick_tile_r(n, budget_bytes):
    """Row-tile size for the tiled path (adjacency tile is the dominant buffer)."""
    bytes_per_row = 4 * n  # bf16 adjacency row, double-buffered by the pipeline
    max_rows = max(8, budget_bytes // max(1, bytes_per_row))
    tile_r = int(min(512, max_rows, n))
    return max(8, (tile_r // 8) * 8)


# ----------------------------------------------------------------------------
# Shared in-kernel helpers
# ----------------------------------------------------------------------------
def _mean_stacks(stacked, f_out):
    """Mean over the K=2 stacks laid side-by-side along the lane axis."""
    if (2 * f_out) % 128 == 0:
        # Lane-aligned: use the XLU rotate (off the VALU critical path) and one
        # boundary-aligned slice instead of two mid-vreg lane slices.
        summed = stacked + pltpu.roll(stacked, shift=f_out, axis=-1)
        return 0.5 * summed[:, :f_out]
    return 0.5 * (stacked[:, :f_out] + stacked[:, f_out:])


def _log_softmax(z):
    m = jnp.max(z, axis=-1, keepdims=True)
    z = z - m
    lse = jnp.log(jnp.sum(jnp.exp(z), axis=-1, keepdims=True))
    return z - lse


# ----------------------------------------------------------------------------
# Path 1: fully VMEM-resident fused kernel (small/medium graphs)
# ----------------------------------------------------------------------------
def _net_arma_fused_kernel(x_ref, adj_ref, dinv_ref, w1_ref, b1_ref,
                           w2_ref, b2_ref, o_ref):
    """conv1 -> (dropout=identity at inference) -> conv2 -> log_softmax.

    x_ref   : [N, F0]          bf16  node features
    adj_ref : [N, N]           bf16  RAW adjacency (no self loops, unnormalized)
    dinv_ref: [N, 1]           f32   D^{-1/2} (gcn_norm factor)
    w*_ref  : [F_in, 4*F_out]  bf16  [W_init[0] | W_init[1] | W_root[0] | W_root[1]]
    b*_ref  : [1, 2*F_out]     f32   [b[0] | b[1]]
    o_ref   : [N, NCLASS]      f32   log-probabilities
    """
    x = x_ref[...]
    adj = adj_ref[...]
    dinv = dinv_ref[...]

    def arma_layer(h_in_bf16, w_cat, b_cat):
        f_out = w_cat.shape[-1] // 4
        # One wide matmul covers both stacks' init AND root transforms.
        h = jnp.dot(h_in_bf16, w_cat, preferred_element_type=jnp.float32)
        h_init = h[:, : 2 * f_out]
        h_root = h[:, 2 * f_out:]
        # Hoist the dinv broadcast once per layer and reuse it twice.
        dinv_b = jnp.broadcast_to(dinv, h_init.shape)
        # A_hat @ h_init == dinv * (A @ (dinv * h_init))   (gcn_norm fused)
        p = jnp.dot(adj, (dinv_b * h_init).astype(jnp.bfloat16),
                    preferred_element_type=jnp.float32)
        p = dinv_b * p
        # + bias, ReLU (ARMAConv default activation, both layers as written),
        # then mean over the K=2 stacks.
        stacked = jnp.maximum(p + h_root + b_cat, 0.0)
        return _mean_stacks(stacked, f_out)

    h1 = arma_layer(x, w1_ref[...], b1_ref[...])
    # F.dropout(training=False) is identity at inference time.
    logits = arma_layer(h1.astype(jnp.bfloat16), w2_ref[...], b2_ref[...])
    o_ref[...] = _log_softmax(logits).astype(o_ref.dtype)


def _net_arma_fused(x_bf16, adj_bf16, dinv, w1, b1, w2, b2):
    n = x_bf16.shape[0]
    nclass = w2.shape[-1] // 4
    # Whole-array VMEM operands, NO grid -> single-buffered (no pipeline
    # double-buffering of the N^2 adjacency).
    vmem_spec = pl.BlockSpec(memory_space=pltpu.MemorySpace.VMEM)
    return pl.pallas_call(
        _net_arma_fused_kernel,
        out_shape=jax.ShapeDtypeStruct((n, nclass), jnp.float32),
        in_specs=[vmem_spec] * 7,
        out_specs=vmem_spec,
        compiler_params=pltpu.CompilerParams(
            vmem_limit_bytes=_vmem_limit_bytes()),
    )(x_bf16, adj_bf16, dinv, w1, b1, w2, b2)


# ----------------------------------------------------------------------------
# Path 2: row-tiled kernel per ARMA layer (large graphs)
# ----------------------------------------------------------------------------
def _arma_tiled_kernel(hmsg_ref, adj_ref, hin_ref, dinv_ref, wroot_ref, b_ref,
                       o_ref, *, final):
    """One ARMA layer for a tile of rows.

    hmsg_ref : [N, 2*F_out]      bf16  precomputed dinv * (H_in @ W_init_cat)
    adj_ref  : [TILE_R, N]       bf16  adjacency row tile
    hin_ref  : [TILE_R, F_in]    bf16  input features row tile (root/skip term)
    dinv_ref : [TILE_R, 1]       f32
    wroot_ref: [F_in, 2*F_out]   bf16
    b_ref    : [1, 2*F_out]      f32
    o_ref    : [TILE_R, F_out]
    """
    f_out = o_ref.shape[-1]
    p = jnp.dot(adj_ref[...], hmsg_ref[...], preferred_element_type=jnp.float32)
    p = dinv_ref[...] * p
    root = jnp.dot(hin_ref[...], wroot_ref[...],
                   preferred_element_type=jnp.float32)
    stacked = jnp.maximum(p + root + b_ref[...], 0.0)
    out = _mean_stacks(stacked, f_out)
    if final:
        out = _log_softmax(out)
    o_ref[...] = out.astype(o_ref.dtype)


def _arma_layer_tiled(h_in_bf16, adj_bf16, dinv, w_cat, b_cat, *, tile_r,
                      final, out_dtype):
    n, f_in = h_in_bf16.shape
    f_out = w_cat.shape[-1] // 4
    w_init = w_cat[:, : 2 * f_out]
    w_root = w_cat[:, 2 * f_out:]
    # Message precompute: O(N*F_in*F_out), negligible vs the O(N^2*F_out)
    # adjacency matmul that the row-tiled pallas grid pipelines below.
    h_msg = (dinv * jnp.dot(h_in_bf16, w_init,
                            preferred_element_type=jnp.float32)
             ).astype(jnp.bfloat16)

    grid = (pl.cdiv(n, tile_r),)
    kernel = functools.partial(_arma_tiled_kernel, final=final)
    return pl.pallas_call(
        kernel,
        out_shape=jax.ShapeDtypeStruct((n, f_out), out_dtype),
        grid=grid,
        in_specs=[
            pl.BlockSpec((n, 2 * f_out), lambda i: (0, 0)),     # messages (resident)
            pl.BlockSpec((tile_r, n), lambda i: (i, 0)),        # adjacency rows
            pl.BlockSpec((tile_r, f_in), lambda i: (i, 0)),     # root/skip rows
            pl.BlockSpec((tile_r, 1), lambda i: (i, 0)),        # dinv rows
            pl.BlockSpec((f_in, 2 * f_out), lambda i: (0, 0)),  # W_root (resident)
            pl.BlockSpec((1, 2 * f_out), lambda i: (0, 0)),     # bias (resident)
        ],
        out_specs=pl.BlockSpec((tile_r, f_out), lambda i: (i, 0)),
        compiler_params=pltpu.CompilerParams(
            # Independent row tiles: shards the dominant adj @ H matmul across
            # both TensorCores on v7x; harmless no-op on v5e/v6e.
            dimension_semantics=("parallel",),
            vmem_limit_bytes=_vmem_limit_bytes(),
        ),
    )(h_msg, adj_bf16, h_in_bf16, dinv, w_root, b_cat)


# ----------------------------------------------------------------------------
# Top-level forward
# ----------------------------------------------------------------------------
def gcn_norm_dinv(adj):
    """D^{-1/2} vector for symmetric gcn_norm (no self loops)."""
    deg = jnp.sum(adj, axis=1, keepdims=True)
    return jnp.where(deg > 0, jax.lax.rsqrt(deg), 0.0).astype(jnp.float32)


def net_arma_forward_fn(params, x, adj, *, force_tiled=False, tile_r=None):
    n, _ = x.shape
    nfeat = params["w1_cat"].shape[0]
    nhid = params["w1_cat"].shape[-1] // 4
    nclass = params["w2_cat"].shape[-1] // 4

    x_bf = x.astype(jnp.bfloat16)
    adj_bf = adj.astype(jnp.bfloat16)
    dinv = gcn_norm_dinv(adj)

    limit = _vmem_limit_bytes()
    resident_ok = _resident_vmem_bytes(n, nfeat, nhid, nclass) < int(0.8 * limit)

    if resident_ok and not force_tiled:
        # Small/medium graph: one fused call, everything single-buffered in VMEM.
        return _net_arma_fused(x_bf, adj_bf, dinv,
                               params["w1_cat"], params["b1_cat"],
                               params["w2_cat"], params["b2_cat"])

    # Large graph (or forced): row-tiled, two pipelined calls (one per layer).
    if tile_r is None:
        tile_r = _pick_tile_r(n, int(0.5 * limit))
    h1 = _arma_layer_tiled(x_bf, adj_bf, dinv, params["w1_cat"],
                           params["b1_cat"], tile_r=tile_r, final=False,
                           out_dtype=jnp.bfloat16)
    # F.dropout(training=False) is identity at inference time.
    return _arma_layer_tiled(h1, adj_bf, dinv, params["w2_cat"],
                             params["b2_cat"], tile_r=tile_r, final=True,
                             out_dtype=jnp.float32)


net_arma_forward = jax.jit(net_arma_forward_fn,
                           static_argnames=("force_tiled", "tile_r"))


# ----------------------------------------------------------------------------
# Parameters (ARMAConv-shaped) and pure-JAX reference
# ----------------------------------------------------------------------------
def init_params(key, nfeat, nhid, nclass):
    ks = jax.random.split(key, 6)

    def glorot(k, shape):
        fan_in, fan_out = shape[-2], shape[-1]
        scale = jnp.sqrt(6.0 / (fan_in + fan_out))
        return jax.random.uniform(k, shape, jnp.float32, -scale, scale)

    return {
        "w_init1": glorot(ks[0], (K_STACKS, nfeat, nhid)),
        "w_root1": glorot(ks[1], (K_STACKS, nfeat, nhid)),
        "b1": jnp.zeros((K_STACKS, 1, nhid), jnp.float32),
        "w_init2": glorot(ks[2], (K_STACKS, nhid, nclass)),
        "w_root2": glorot(ks[3], (K_STACKS, nhid, nclass)),
        "b2": jnp.zeros((K_STACKS, 1, nclass), jnp.float32),
    }


def pack_params(raw):
    """Concatenate K=2 stack weights into one wide bf16 matrix per layer."""
    def cat_w(w_init, w_root):
        parts = ([w_init[k] for k in range(K_STACKS)]
                 + [w_root[k] for k in range(K_STACKS)])
        return jnp.concatenate(parts, axis=-1).astype(jnp.bfloat16)

    def cat_b(b):
        return jnp.concatenate([b[k] for k in range(K_STACKS)],
                               axis=-1).astype(jnp.float32)

    return {
        "w1_cat": cat_w(raw["w_init1"], raw["w_root1"]),
        "b1_cat": cat_b(raw["b1"]),
        "w2_cat": cat_w(raw["w_init2"], raw["w_root2"]),
        "b2_cat": cat_b(raw["b2"]),
    }


def net_arma_reference(raw, x, adj):
    """Pure-JAX f32 reference of the same forward pass."""
    deg = jnp.sum(adj, axis=1)
    dinv = jnp.where(deg > 0, 1.0 / jnp.sqrt(deg), 0.0)
    a_hat = dinv[:, None] * adj * dinv[None, :]

    def arma(h, w_init, w_root, b):
        acc = 0.0
        for k in range(K_STACKS):
            t = a_hat @ (h @ w_init[k]) + h @ w_root[k] + b[k]
            acc = acc + jnp.maximum(t, 0.0)
        return acc / K_STACKS

    h = arma(x, raw["w_init1"], raw["w_root1"], raw["b1"])
    o = arma(h, raw["w_init2"], raw["w_root2"], raw["b2"])
    return jax.nn.log_softmax(o, axis=1)


if __name__ == "__main__":
    N, NFEAT, NHID, NCLASS = 16, 32, 32, 8

    key = jax.random.PRNGKey(0)
    kx, kadj, kparams = jax.random.split(key, 3)

    x = jax.random.normal(kx, (N, NFEAT), jnp.float32)
    # Random symmetric binary adjacency (no self loops).
    a = (jax.random.uniform(kadj, (N, N)) < 0.3).astype(jnp.float32)
    adj = jnp.maximum(a, a.T) * (1.0 - jnp.eye(N, dtype=jnp.float32))

    raw_params = init_params(kparams, NFEAT, NHID, NCLASS)
    params = pack_params(raw_params)

    ref = net_arma_reference(raw_params, x, adj)

    # Fully-resident fused path (default at this size).
    out = net_arma_forward(params, x, adj)
    jax.block_until_ready(out)
    assert out.shape == (N, NCLASS)
    assert jnp.allclose(jnp.sum(jnp.exp(out), axis=1), 1.0, atol=1e-4)
    assert float(jnp.max(jnp.abs(out - ref))) < 0.3, "fused kernel diverges"

    # Row-tiled large-graph path, forced at small size to validate structure.
    out_tiled = net_arma_forward(params, x, adj, force_tiled=True, tile_r=8)
    jax.block_until_ready(out_tiled)
    assert out_tiled.shape == (N, NCLASS)
    assert jnp.allclose(jnp.sum(jnp.exp(out_tiled), axis=1), 1.0, atol=1e-4)
    assert float(jnp.max(jnp.abs(out_tiled - ref))) < 0.3, "tiled kernel diverges"
    assert float(jnp.max(jnp.abs(out_tiled - out))) < 0.05, "paths disagree"

    print("KERNEL_OK")
</pallas_src>

<mosaic_0001>
module attributes {stable_mosaic.version = 11 : i64} {
  func.func @_net_arma_fused_kernel(%arg0: memref<16x32xbf16, #tpu.memory_space<vmem>>, %arg1: memref<16x16xbf16, #tpu.memory_space<vmem>>, %arg2: memref<16x1xf32, #tpu.memory_space<vmem>>, %arg3: memref<32x128xbf16, #tpu.memory_space<vmem>>, %arg4: memref<1x64xf32, #tpu.memory_space<vmem>>, %arg5: memref<32x32xbf16, #tpu.memory_space<vmem>>, %arg6: memref<1x16xf32, #tpu.memory_space<vmem>>, %arg7: memref<16x8xf32, #tpu.memory_space<vmem>>) attributes {dimension_semantics = [], scalar_prefetch = 0 : i64, scratch_operands = 0 : i64, tpu.core_type = #tpu.core_type<tc>} {
    %c0 = arith.constant 0 : index
    %c0_0 = arith.constant 0 : index
    %0 = vector.load %arg0[%c0, %c0_0] : memref<16x32xbf16, #tpu.memory_space<vmem>>, vector<16x32xbf16>
    %c0_1 = arith.constant 0 : index
    %c0_2 = arith.constant 0 : index
    %1 = vector.load %arg1[%c0_1, %c0_2] : memref<16x16xbf16, #tpu.memory_space<vmem>>, vector<16x16xbf16>
    %c0_3 = arith.constant 0 : index
    %c0_4 = arith.constant 0 : index
    %2 = vector.load %arg2[%c0_3, %c0_4] : memref<16x1xf32, #tpu.memory_space<vmem>>, vector<16x1xf32>
    %c0_5 = arith.constant 0 : index
    %c0_6 = arith.constant 0 : index
    %3 = vector.load %arg3[%c0_5, %c0_6] : memref<32x128xbf16, #tpu.memory_space<vmem>>, vector<32x128xbf16>
    %c0_7 = arith.constant 0 : index
    %c0_8 = arith.constant 0 : index
    %4 = vector.load %arg4[%c0_7, %c0_8] : memref<1x64xf32, #tpu.memory_space<vmem>>, vector<1x64xf32>
    %cst = arith.constant dense<0.000000e+00> : vector<16x128xf32>
    %5 = tpu.matmul %0, %3, %cst {dimension_numbers = #tpu.dot_dimension_numbers<[1], [0], [0], [1], [0, 0, 1, 1], [], []>} : vector<16x32xbf16>, vector<32x128xbf16>, vector<16x128xf32> -> vector<16x128xf32>
    %6 = vector.extract_strided_slice %5 {offsets = [0, 0], sizes = [16, 64], strides = [1, 1]} : vector<16x128xf32> to vector<16x64xf32>
    %7 = vector.extract_strided_slice %5 {offsets = [0, 64], sizes = [16, 64], strides = [1, 1]} : vector<16x128xf32> to vector<16x64xf32>
    %8 = vector.shape_cast %2 : vector<16x1xf32> to vector<16x1xf32>
    %9 = vector.broadcast %8 : vector<16x1xf32> to vector<16x64xf32>
    %10 = arith.mulf %9, %6 : vector<16x64xf32>
    %11 = arith.truncf %10 : vector<16x64xf32> to vector<16x64xbf16>
    %cst_9 = arith.constant dense<0.000000e+00> : vector<16x64xf32>
    %12 = tpu.matmul %1, %11, %cst_9 {dimension_numbers = #tpu.dot_dimension_numbers<[1], [0], [0], [1], [0, 0, 1, 1], [], []>} : vector<16x16xbf16>, vector<16x64xbf16>, vector<16x64xf32> -> vector<16x64xf32>
    %13 = arith.mulf %9, %12 : vector<16x64xf32>
    %14 = arith.addf %13, %7 : vector<16x64xf32>
    %15 = vector.broadcast %4 : vector<1x64xf32> to vector<16x64xf32>
    %16 = arith.addf %14, %15 : vector<16x64xf32>
    %cst_10 = arith.constant 0.000000e+00 : f32
    %17 = vector.broadcast %cst_10 : f32 to vector<16x64xf32>
    %18 = arith.maximumf %16, %17 : vector<16x64xf32>
    %19 = vector.extract_strided_slice %18 {offsets = [0, 0], sizes = [16, 32], strides = [1, 1]} : vector<16x64xf32> to vector<16x32xf32>
    %20 = vector.extract_strided_slice %18 {offsets = [0, 32], sizes = [16, 32], strides = [1, 1]} : vector<16x64xf32> to vector<16x32xf32>
    %21 = arith.addf %19, %20 : vector<16x32xf32>
    %cst_11 = arith.constant 5.000000e-01 : f32
    %22 = vector.broadcast %cst_11 : f32 to vector<16x32xf32>
    %23 = arith.mulf %22, %21 : vector<16x32xf32>
    %24 = arith.truncf %23 : vector<16x32xf32> to vector<16x32xbf16>
    %c0_12 = arith.constant 0 : index
    %c0_13 = arith.constant 0 : index
    %25 = vector.load %arg5[%c0_12, %c0_13] : memref<32x32xbf16, #tpu.memory_space<vmem>>, vector<32x32xbf16>
    %c0_14 = arith.constant 0 : index
    %c0_15 = arith.constant 0 : index
    %26 = vector.load %arg6[%c0_14, %c0_15] : memref<1x16xf32, #tpu.memory_space<vmem>>, vector<1x16xf32>
    %cst_16 = arith.constant dense<0.000000e+00> : vector<16x32xf32>
    %27 = tpu.matmul %24, %25, %cst_16 {dimension_numbers = #tpu.dot_dimension_numbers<[1], [0], [0], [1], [0, 0, 1, 1], [], []>} : vector<16x32xbf16>, vector<32x32xbf16>, vector<16x32xf32> -> vector<16x32xf32>
    %28 = vector.extract_strided_slice %27 {offsets = [0, 0], sizes = [16, 16], strides = [1, 1]} : vector<16x32xf32> to vector<16x16xf32>
    %29 = vector.extract_strided_slice %27 {offsets = [0, 16], sizes = [16, 16], strides = [1, 1]} : vector<16x32xf32> to vector<16x16xf32>
    %30 = vector.shape_cast %2 : vector<16x1xf32> to vector<16x1xf32>
    %31 = vector.broadcast %30 : vector<16x1xf32> to vector<16x16xf32>
    %32 = arith.mulf %31, %28 : vector<16x16xf32>
    %33 = arith.truncf %32 : vector<16x16xf32> to vector<16x16xbf16>
    %cst_17 = arith.constant dense<0.000000e+00> : vector<16x16xf32>
    %34 = tpu.matmul %1, %33, %cst_17 {dimension_numbers = #tpu.dot_dimension_numbers<[1], [0], [0], [1], [0, 0, 1, 1], [], []>} : vector<16x16xbf16>, vector<16x16xbf16>, vector<16x16xf32> -> vector<16x16xf32>
    %35 = arith.mulf %31, %34 : vector<16x16xf32>
    %36 = arith.addf %35, %29 : vector<16x16xf32>
    %37 = vector.broadcast %26 : vector<1x16xf32> to vector<16x16xf32>
    %38 = arith.addf %36, %37 : vector<16x16xf32>
    %cst_18 = arith.constant 0.000000e+00 : f32
    %39 = vector.broadcast %cst_18 : f32 to vector<16x16xf32>
    %40 = arith.maximumf %38, %39 : vector<16x16xf32>
    %41 = vector.extract_strided_slice %40 {offsets = [0, 0], sizes = [16, 8], strides = [1, 1]} : vector<16x16xf32> to vector<16x8xf32>
    %42 = vector.extract_strided_slice %40 {offsets = [0, 8], sizes = [16, 8], strides = [1, 1]} : vector<16x16xf32> to vector<16x8xf32>
    %43 = arith.addf %41, %42 : vector<16x8xf32>
    %cst_19 = arith.constant 5.000000e-01 : f32
    %44 = vector.broadcast %cst_19 : f32 to vector<16x8xf32>
    %45 = arith.mulf %44, %43 : vector<16x8xf32>
    %cst_20 = arith.constant dense<0xFF800000> : vector<16xf32>
    %46 = vector.multi_reduction <maximumf>, %45, %cst_20 [1] : vector<16x8xf32> to vector<16xf32>
    %47 = vector.shape_cast %46 : vector<16xf32> to vector<16x1xf32>
    %48 = vector.broadcast %47 : vector<16x1xf32> to vector<16x8xf32>
    %49 = arith.subf %45, %48 : vector<16x8xf32>
    %50 = math.exp %49 : vector<16x8xf32>
    %cst_21 = arith.constant dense<0.000000e+00> : vector<16xf32>
    %51 = vector.multi_reduction <add>, %50, %cst_21 [1] : vector<16x8xf32> to vector<16xf32>
    %52 = vector.shape_cast %51 : vector<16xf32> to vector<16x1xf32>
    %53 = math.log %52 : vector<16x1xf32>
    %54 = vector.broadcast %53 : vector<16x1xf32> to vector<16x8xf32>
    %55 = arith.subf %49, %54 : vector<16x8xf32>
    %c0_22 = arith.constant 0 : index
    %c0_23 = arith.constant 0 : index
    %56 = vector.load %arg7[%c0_22, %c0_23] : memref<16x8xf32, #tpu.memory_space<vmem>>, vector<16x8xf32>
    tpu.vector_store %arg7[%c0_22, %c0_23], %55 {strides = array<i32>} : memref<16x8xf32, #tpu.memory_space<vmem>>, vector<16x8xf32>,
    return
  }
}

</mosaic_0001>

<llo_original>
// kernel: net_arma_forward_fn.1
$region0: #{net_arma_forward_fn.1}
  #allocation0 [shape = 'u32[]', space=smem, size = 0x4, offset = 0x4, fixed_abs, tag = 'smem constant byte address 0x4 - core index']
  #allocation1 [shape = 'u32[144,128]{1,0:T(1,128)}', space=vmem, size = 0x12000, scoped, tag = 'internal scratch']
  %s0 = inlined_call_operand.vmem [shape: bf16[16,32], index: 0, kind: input, shape index: {}]
  %s1 = inlined_call_operand.vmem [shape: bf16[16,16], index: 1, kind: input, shape index: {}]
  %s2 = inlined_call_operand.vmem [shape: f32[16,1], index: 2, kind: input, shape index: {}]
  %s3 = inlined_call_operand.vmem [shape: bf16[32,128], index: 3, kind: input, shape index: {}]
  %s4 = inlined_call_operand.vmem [shape: f32[1,64], index: 4, kind: input, shape index: {}]
  %s5 = inlined_call_operand.vmem [shape: bf16[32,32], index: 5, kind: input, shape index: {}]
  %s6 = inlined_call_operand.vmem [shape: f32[1,16], index: 6, kind: input, shape index: {}]
  %s7 = inlined_call_operand.vmem [shape: f32[16,8], index: 7, kind: output, shape index: {}]
  %s8 = sld [smem:[#allocation0]]
  $region38: #{net_arma_forward_fn.1} parent=0
    _
  %s10 = ssub.s32 1, %s8
  %s11 = scalar_select 0, %s10, %s8
  // Predicated region
  $region2: #{net_arma_forward_fn.1} parent=0 // pred_check
    _
  $region3: #{net_arma_forward_fn.1} parent=0 // pred_check_branch
    %13 = sbr.rel (0) target = $region5
  $region4: #{net_arma_forward_fn.1} parent=0 // pred_region
    _
  $region5: #{net_arma_forward_fn.1} parent=0 // pred_fallthru
    _
  // Predicated region
  $region6: #{net_arma_forward_fn.1} parent=0 // pred_check
    _
  $region7: #{net_arma_forward_fn.1} parent=0 // pred_check_branch
    %15 = sbr.rel (0) target = $region9
  $region8: #{net_arma_forward_fn.1} parent=0 // pred_region
    _
  $region9: #{net_arma_forward_fn.1} parent=0 // pred_fallthru
    _
  // Predicated region
  $region10: #{net_arma_forward_fn.1} parent=0 // pred_check
    _
  $region11: #{net_arma_forward_fn.1} parent=0 // pred_check_branch
    %17 = sbr.rel (0) target = $region13
  $region12: #{net_arma_forward_fn.1} parent=0 // pred_region
    _
  $region13: #{net_arma_forward_fn.1} parent=0 // pred_fallthru
    _
  // Predicated region
  $region14: #{net_arma_forward_fn.1} parent=0 // pred_check
    _
  $region15: #{net_arma_forward_fn.1} parent=0 // pred_check_branch
    %19 = sbr.rel (0) target = $region17
  $region16: #{net_arma_forward_fn.1} parent=0 // pred_region
    _
  $region17: #{net_arma_forward_fn.1} parent=0 // pred_fallthru
    _
  // Predicated region
  $region18: #{net_arma_forward_fn.1} parent=0 // pred_check
    _
  $region19: #{net_arma_forward_fn.1} parent=0 // pred_check_branch
    %21 = sbr.rel (0) target = $region21
  $region20: #{net_arma_forward_fn.1} parent=0 // pred_region
    _
  $region21: #{net_arma_forward_fn.1} parent=0 // pred_fallthru
    _
  // Predicated region
  $region22: #{net_arma_forward_fn.1} parent=0 // pred_check
    _
  $region23: #{net_arma_forward_fn.1} parent=0 // pred_check_branch
    %23 = sbr.rel (0) target = $region25
  $region24: #{net_arma_forward_fn.1} parent=0 // pred_region
    _
  $region25: #{net_arma_forward_fn.1} parent=0 // pred_fallthru
    _
  // Predicated region
  $region26: #{net_arma_forward_fn.1} parent=0 // pred_check
    _
  $region27: #{net_arma_forward_fn.1} parent=0 // pred_check_branch
    %25 = sbr.rel (0) target = $region29
  $region28: #{net_arma_forward_fn.1} parent=0 // pred_region
    _
  $region29: #{net_arma_forward_fn.1} parent=0 // pred_fallthru
    _
  %v27 = vld [vmem:[%s0] sm:$0xf]
  %v28 = vld [vmem:[%s0 + $0x4] sm:$0xf]
  %v29 = vld [vmem:[%s1] sm:$0xf]
  %v30 = vld [vmem:[%s1 + $0x4] sm:$0xf]
  %v31 = vld [vmem:[%s2] sm:$0xff]
  %v32 = vld [vmem:[%s2 + $0x8] sm:$0xff]
  %v33 = vld [vmem:[%s3] sm:$0xf]
  %v34 = vld [vmem:[%s3 + $0x4] sm:$0xf]
  %v35 = vld [vmem:[%s3 + $0x8] sm:$0xf]
  %v36 = vld [vmem:[%s3 + $0xc] sm:$0xf]
  %v37 = vld [vmem:[%s4] sm:$0x1]
  %v40 = vunpack.c.l.b16 %v27
  %v41 = vunpack.c.l.b16 %v28
  %v42 = vpack.c.b16 %v41, %v40
  %v47 = vunpack.c.l.b16 %v33
  %v48 = vunpack.c.l.b16 %v34
  %v49 = vunpack.c.l.b16 %v35
  %v50 = vunpack.c.l.b16 %v36
  %v51 = vpack.c.b16 %v48, %v47
  %v52 = vpack.c.b16 %v50, %v49
  %vm55 = vcmask 261120
  %v57 = vsel %vm55, %v42, 0
  %59 = vmatprep.subr.bf16.mxu0 0
  %60 = vmatpush1.bf16.msra.mxu0 %v51
  %61 = vmatprep.subr.bf16.mxu0 0
  %62 = vmatpush1.bf16.msra.mxu0 %v52
  %63 = vmatprep.subr.bf16.mxu0 0
  %64 = vmatpush1.bf16.msra.mxu0 0
  %65 = vmatprep.subr.bf16.mxu0 0
  %66 = vmatpush1.bf16.msra.mxu0 0
  %67 = vmatprep.subr.bf16.mxu0 0
  %68 = vmatpush1.bf16.msra.mxu0 0
  %69 = vmatprep.subr.bf16.mxu0 0
  %70 = vmatpush1.bf16.msra.mxu0 0
  %71 = vmatprep.subr.bf16.mxu0 0
  %72 = vmatpush1.bf16.msra.mxu0 0
  %73 = vmatprep.subr.bf16.mxu0 0
  %74 = vmatpush1.bf16.msra.mxu0 0
  %75 = vmatprep.subr.bf16.mxu0 0
  %76 = vmatpush1.bf16.msra.mxu0 0
  %77 = vmatprep.subr.bf16.mxu0 0
  %78 = vmatpush1.bf16.msra.mxu0 0
  %79 = vmatprep.subr.bf16.mxu0 0
  %80 = vmatpush1.bf16.msra.mxu0 0
  %81 = vmatprep.subr.bf16.mxu0 0
  %82 = vmatpush1.bf16.msra.mxu0 0
  %83 = vmatprep.subr.bf16.mxu0 0
  %84 = vmatpush1.bf16.msra.mxu0 0
  %85 = vmatprep.subr.bf16.mxu0 0
  %86 = vmatpush1.bf16.msra.mxu0 0
  %87 = vmatprep.subr.bf16.mxu0 0
  %88 = vmatpush1.bf16.msra.mxu0 0
  %89 = vmatprep.subr.bf16.mxu0 0
  %90 = vmatpush1.bf16.msra.mxu0 0
  %91 = vmatprep.mubr.bf16.mxu0 0
  %92 = vmatmul.mubr.bf16.gmra.mrb[0].mxu0 %v57
  %v93 = vpop.f32.mrb[0].mxu0
  %v94 = vadd.f32 0.0, %v93
  %v95 = vpop.f32.mrb[0].mxu0
  %v96 = vpop.f32.mrb[0].mxu0
  %v97 = vadd.f32 0.0, %v96
  %v98 = vpop.f32.mrb[0].mxu0
  %99 = vdwg.mxu0
  %101 = vset.pattern.permute.xlu0 0
  %102 = vperm.xlu0 %101, %v31
  %v103 = vpop.permute.xlu0 %102
  %106 = vset.pattern.permute.xlu0 0
  %107 = vperm.xlu0 %106, %v32
  %v108 = vpop.permute.xlu0 %107
  %v110 = vmul.f32 %v103, %v94
  %v111 = vmul.f32 %v108, %v97
  %v112 = vpack.c.bf16 %v111, %v110
  %v115 = vunpack.c.l.b16 %v29
  %v116 = vunpack.c.l.b16 %v30
  %v117 = vpack.c.b16 %v116, %v115
  %vm118 = vcmask 130048
  %v120 = vsel %vm118, %v117, 0
  %122 = vmatprep.subr.bf16.mxu0 0
  %123 = vmatpush1.bf16.msra.mxu0 %v112
  %124 = vmatprep.subr.bf16.mxu0 0
  %125 = vmatpush1.bf16.msra.mxu0 0
  %126 = vmatprep.subr.bf16.mxu0 0
  %127 = vmatpush1.bf16.msra.mxu0 0
  %128 = vmatprep.subr.bf16.mxu0 0
  %129 = vmatpush1.bf16.msra.mxu0 0
  %130 = vmatprep.subr.bf16.mxu0 0
  %131 = vmatpush1.bf16.msra.mxu0 0
  %132 = vmatprep.subr.bf16.mxu0 0
  %133 = vmatpush1.bf16.msra.mxu0 0
  %134 = vmatprep.subr.bf16.mxu0 0
  %135 = vmatpush1.bf16.msra.mxu0 0
  %136 = vmatprep.subr.bf16.mxu0 0
  %137 = vmatpush1.bf16.msra.mxu0 0
  %138 = vmatprep.subr.bf16.mxu0 0
  %139 = vmatpush1.bf16.msra.mxu0 0
  %140 = vmatprep.subr.bf16.mxu0 0
  %141 = vmatpush1.bf16.msra.mxu0 0
  %142 = vmatprep.subr.bf16.mxu0 0
  %143 = vmatpush1.bf16.msra.mxu0 0
  %144 = vmatprep.subr.bf16.mxu0 0
  %145 = vmatpush1.bf16.msra.mxu0 0
  %146 = vmatprep.subr.bf16.mxu0 0
  %147 = vmatpush1.bf16.msra.mxu0 0
  %148 = vmatprep.subr.bf16.mxu0 0
  %149 = vmatpush1.bf16.msra.mxu0 0
  %150 = vmatprep.subr.bf16.mxu0 0
  %151 = vmatpush1.bf16.msra.mxu0 0
  %152 = vmatprep.subr.bf16.mxu0 0
  %153 = vmatpush1.bf16.msra.mxu0 0
  %154 = vmatprep.mubr.bf16.mxu0 0
  %155 = vmatmul.mubr.bf16.gmra.mrb[0].mxu0 %v120
  %v156 = vpop.f32.mrb[0].mxu0
  %v157 = vadd.f32 0.0, %v156
  %v158 = vpop.f32.mrb[0].mxu0
  %v159 = vpop.f32.mrb[0].mxu0
  %v160 = vadd.f32 0.0, %v159
  %v161 = vpop.f32.mrb[0].mxu0
  %162 = vdwg.mxu0
  %v163 = vmul.f32 %v103, %v157
  %v164 = vmul.f32 %v108, %v160
  %167 = vrot.lane.b32.xlu0 %v94, 64
  %v168 = vpop.permute.xlu0 %167
  %169 = vrot.lane.b32.xlu0 %v97, 64
  %v170 = vpop.permute.xlu0 %169
  %v173 = vadd.f32 %v163, %v168
  %v174 = vadd.f32 %v164, %v170
  %v176 = vlaneseq
  %v177 = vshrl.u32 %v176, 7
  %v178 = vsub.s32 0, %v177
  %v179 = vrot.slane %v37, %v178
  %v181 = vadd.f32 %v173, %v179
  %v182 = vadd.f32 %v174, %v179
  %v183 = vmax.f32 %v181, 0.0
  %v184 = vmax.f32 %v182, 0.0
  %187 = vrot.lane.b32.xlu0 %v183, 96
  %v188 = vpop.permute.xlu0 %187
  %189 = vrot.lane.b32.xlu0 %v184, 96
  %v190 = vpop.permute.xlu0 %189
  %v193 = vadd.f32 %v183, %v188
  %v194 = vadd.f32 %v184, %v190
  %v195 = vmul.f32 %v193, 0.5
  %v196 = vmul.f32 %v194, 0.5
  %v197 = vpack.c.bf16 %v196, %v195
  %v198 = vld [vmem:[%s5] sm:$0xf]
  %v199 = vld [vmem:[%s5 + $0x4] sm:$0xf]
  %v200 = vld [vmem:[%s5 + $0x8] sm:$0xf]
  %v201 = vld [vmem:[%s5 + $0xc] sm:$0xf]
  %v202 = vld [vmem:[%s6] sm:$0x1]
  %v207 = vunpack.c.l.b16 %v198
  %v208 = vunpack.c.l.b16 %v199
  %v209 = vunpack.c.l.b16 %v200
  %v210 = vunpack.c.l.b16 %v201
  %v211 = vpack.c.b16 %v208, %v207
  %v212 = vpack.c.b16 %v210, %v209
  %v216 = vsel %vm55, %v197, 0
  %218 = vmatprep.subr.bf16.mxu0 0
  %219 = vmatpush1.bf16.msra.mxu0 %v211
  %220 = vmatprep.subr.bf16.mxu0 0
  %221 = vmatpush1.bf16.msra.mxu0 %v212
  %222 = vmatprep.subr.bf16.mxu0 0
  %223 = vmatpush1.bf16.msra.mxu0 0
  %224 = vmatprep.subr.bf16.mxu0 0
  %225 = vmatpush1.bf16.msra.mxu0 0
  %226 = vmatprep.subr.bf16.mxu0 0
  %227 = vmatpush1.bf16.msra.mxu0 0
  %228 = vmatprep.subr.bf16.mxu0 0
  %229 = vmatpush1.bf16.msra.mxu0 0
  %230 = vmatprep.subr.bf16.mxu0 0
  %231 = vmatpush1.bf16.msra.mxu0 0
  %232 = vmatprep.subr.bf16.mxu0 0
  %233 = vmatpush1.bf16.msra.mxu0 0
  %234 = vmatprep.subr.bf16.mxu0 0
  %235 = vmatpush1.bf16.msra.mxu0 0
  %236 = vmatprep.subr.bf16.mxu0 0
  %237 = vmatpush1.bf16.msra.mxu0 0
  %238 = vmatprep.subr.bf16.mxu0 0
  %239 = vmatpush1.bf16.msra.mxu0 0
  %240 = vmatprep.subr.bf16.mxu0 0
  %241 = vmatpush1.bf16.msra.mxu0 0
  %242 = vmatprep.subr.bf16.mxu0 0
  %243 = vmatpush1.bf16.msra.mxu0 0
  %244 = vmatprep.subr.bf16.mxu0 0
  %245 = vmatpush1.bf16.msra.mxu0 0
  %246 = vmatprep.subr.bf16.mxu0 0
  %247 = vmatpush1.bf16.msra.mxu0 0
  %248 = vmatprep.subr.bf16.mxu0 0
  %249 = vmatpush1.bf16.msra.mxu0 0
  %250 = vmatprep.mubr.bf16.mxu0 0
  %251 = vmatmul.mubr.bf16.gmra.mrb[0].mxu0 %v216
  %v252 = vpop.f32.mrb[0].mxu0
  %v253 = vadd.f32 0.0, %v252
  %v254 = vpop.f32.mrb[0].mxu0
  %v255 = vpop.f32.mrb[0].mxu0
  %v256 = vadd.f32 0.0, %v255
  %v257 = vpop.f32.mrb[0].mxu0
  %258 = vdwg.mxu0
  %v259 = vmul.f32 %v103, %v253
  %v260 = vmul.f32 %v108, %v256
  %v261 = vpack.c.bf16 %v260, %v259
  %262 = vmatprep.subr.bf16.mxu0 0
  %263 = vmatpush1.bf16.msra.mxu0 %v261
  %264 = vmatprep.subr.bf16.mxu0 0
  %265 = vmatpush1.bf16.msra.mxu0 0
  %266 = vmatprep.subr.bf16.mxu0 0
  %267 = vmatpush1.bf16.msra.mxu0 0
  %268 = vmatprep.subr.bf16.mxu0 0
  %269 = vmatpush1.bf16.msra.mxu0 0
  %270 = vmatprep.subr.bf16.mxu0 0
  %271 = vmatpush1.bf16.msra.mxu0 0
  %272 = vmatprep.subr.bf16.mxu0 0
  %273 = vmatpush1.bf16.msra.mxu0 0
  %274 = vmatprep.subr.bf16.mxu0 0
  %275 = vmatpush1.bf16.msra.mxu0 0
  %276 = vmatprep.subr.bf16.mxu0 0
  %277 = vmatpush1.bf16.msra.mxu0 0
  %278 = vmatprep.subr.bf16.mxu0 0
  %279 = vmatpush1.bf16.msra.mxu0 0
  %280 = vmatprep.subr.bf16.mxu0 0
  %281 = vmatpush1.bf16.msra.mxu0 0
  %282 = vmatprep.subr.bf16.mxu0 0
  %283 = vmatpush1.bf16.msra.mxu0 0
  %284 = vmatprep.subr.bf16.mxu0 0
  %285 = vmatpush1.bf16.msra.mxu0 0
  %286 = vmatprep.subr.bf16.mxu0 0
  %287 = vmatpush1.bf16.msra.mxu0 0
  %288 = vmatprep.subr.bf16.mxu0 0
  %289 = vmatpush1.bf16.msra.mxu0 0
  %290 = vmatprep.subr.bf16.mxu0 0
  %291 = vmatpush1.bf16.msra.mxu0 0
  %292 = vmatprep.subr.bf16.mxu0 0
  %293 = vmatpush1.bf16.msra.mxu0 0
  %294 = vmatprep.mubr.bf16.mxu0 0
  %295 = vmatmul.mubr.bf16.gmra.mrb[0].mxu0 %v120
  %v296 = vpop.f32.mrb[0].mxu0
  %v297 = vadd.f32 0.0, %v296
  %v298 = vpop.f32.mrb[0].mxu0
  %v299 = vpop.f32.mrb[0].mxu0
  %v300 = vadd.f32 0.0, %v299
  %v301 = vpop.f32.mrb[0].mxu0
  %302 = vdwg.mxu0
  %v303 = vmul.f32 %v103, %v297
  %v304 = vmul.f32 %v108, %v300
  %307 = vrot.lane.b32.xlu0 %v253, 112
  %v308 = vpop.permute.xlu0 %307
  %309 = vrot.lane.b32.xlu0 %v256, 112
  %v310 = vpop.permute.xlu0 %309
  %v313 = vadd.f32 %v303, %v308
  %v314 = vadd.f32 %v304, %v310
  %v316 = vlaneseq
  %v317 = vshrl.u32 %v316, 7
  %v318 = vsub.s32 0, %v317
  %v319 = vrot.slane %v202, %v318
  %v321 = vadd.f32 %v313, %v319
  %v322 = vadd.f32 %v314, %v319
  %v323 = vmax.f32 %v321, 0.0
  %v324 = vmax.f32 %v322, 0.0
  %327 = vrot.lane.b32.xlu0 %v323, 120
  %v328 = vpop.permute.xlu0 %327
  %329 = vrot.lane.b32.xlu0 %v324, 120
  %v330 = vpop.permute.xlu0 %329
  %v333 = vadd.f32 %v323, %v328
  %v334 = vadd.f32 %v324, %v330
  %v335 = vmul.f32 %v333, 0.5
  %v336 = vmul.f32 %v334, 0.5
  %vm337 = vcmask 64512
  %v338 = vsel %vm337, %v335, -inf
  %339 = vmax.xlane.f32.xlu0 %v338
  %v340 = vpop.xlane.xlu0 %339
  %v341 = vsel %vm337, %v336, -inf
  %342 = vmax.xlane.f32.xlu0 %v341
  %v343 = vpop.xlane.xlu0 %342
  %v344 = vsub.f32 %v335, %v340
  %v345 = vsub.f32 %v336, %v343
  %v346 = vmul.f32 %v344, 1.442695
  %v347 = vpow.pop %v346
  %v348 = vmul.f32 %v345, 1.442695
  %v349 = vpow.pop %v348
  %v350 = vsel %vm337, %v347, 0.0
  %351 = vadd.xlane.f32.xlu0 %v350
  %v352 = vpop.xlane.xlu0 %351
  %v353 = vsel %vm337, %v349, 0.0
  %354 = vadd.xlane.f32.xlu0 %v353
  %v355 = vpop.xlane.xlu0 %354
  %v356 = vlog2.pop %v352
  %v357 = vmul.f32 %v356, 0.6931472
  %v358 = vlog2.pop %v355
  %v359 = vmul.f32 %v358, 0.6931472
  %v360 = vsub.f32 %v344, %v357
  %v361 = vsub.f32 %v345, %v359
  %362 = vst.msk [vmem:[%s7] sm:$0xff] %vm337, %v360
  %363 = vst.msk [vmem:[%s7 + $0x8] sm:$0xff] %vm337, %v361
  // Predicated region
  $region30: #{net_arma_forward_fn.1} parent=0 // pred_check
    _
  $region31: #{net_arma_forward_fn.1} parent=0 // pred_check_branch
    %365 = sbr.rel (0) target = $region33
  $region32: #{net_arma_forward_fn.1} parent=0 // pred_region
    _
  $region33: #{net_arma_forward_fn.1} parent=0 // pred_fallthru
    _
  // Predicated region
  $region34: #{net_arma_forward_fn.1} parent=0 // pred_check
    _
  $region35: #{net_arma_forward_fn.1} parent=0 // pred_check_branch
    %367 = sbr.rel (0) target = $region37
  $region36: #{net_arma_forward_fn.1} parent=0 // pred_region
    _
  $region37: #{net_arma_forward_fn.1} parent=0 // pred_fallthru
    _

</llo_original>
